<compile_context>
chip_gen: v5e
topology: v5e:2x2
jax: 0.10.0
libtpu: 0.0.40
codegen_flags: <defaults>
</compile_context>

<pallas_src>
import jax
import jax.numpy as jnp
from jax.experimental import pallas as pl
from jax.experimental.pallas import tpu as pltpu

OBS_DIM = 4
HIDDEN = 32
N_ACTIONS = 2
LANES = 128  # lane-padded feature width used inside the kernel

# f32 slab (VPU-side params), row layout; every offset is a multiple of 8 so
# static slices are (8,128)-tile aligned.  Shape (32, 128) f32 = 16 KiB.
_W1_OFF = 0    # w1 (4,32)  in rows [0:4]
_B1_OFF = 8    # b1 (1,32)  in row  [8]
_B2_OFF = 16   # b2 (1,32)  in row  [16]
_B3_OFF = 24   # b3 (1,2)   in row  [24]
_F32_ROWS = 32

# bf16 slab (MXU operands); offsets are multiples of 16 (bf16 sublane tile).
# Shape (256, 128) bf16 = 64 KiB.
_W2_OFF = 0    # w2 (32,32) zero-padded to 128x128, rows [0:128]
_W3_OFF = 128  # w3 (32,2)  zero-padded to 128x128, rows [128:256]
_BF16_ROWS = 256


def _round_up(n, m):
    return ((n + m - 1) // m) * m


def _dqn_mlp_kernel(x_ref, pf_ref, pb_ref, o_ref):
    x = x_ref[...]                                     # (TB, OBS_DIM) f32

    w1 = pf_ref[pl.ds(_W1_OFF, 8), :]                  # (8, 128) f32, rows >= 4 are zero
    b1 = pf_ref[pl.ds(_B1_OFF, 1), :]                  # (1, 128) f32
    b2 = pf_ref[pl.ds(_B2_OFF, 1), :]                  # (1, 128) f32
    b3 = pf_ref[pl.ds(_B3_OFF, 1), :]                  # (1, 128) f32
    w2 = pb_ref[pl.ds(_W2_OFF, 128), :]                # (128, 128) bf16
    w3 = pb_ref[pl.ds(_W3_OFF, 128), :]                # (128, 128) bf16

    # Layer 1 on the VPU: K=4 is far below the MXU contraction width, so do
    # four unrolled rank-1 FMAs (x[:, k] outer w1[k, :]) in exact f32.
    acc = x[:, 0:1] * w1[0:1, :] + b1                  # (TB, 128)
    for k in range(1, OBS_DIM):
        acc = acc + x[:, k:k + 1] * w1[k:k + 1, :]
    h1 = jnp.maximum(acc, 0.0)                         # padded cols stay 0

    # Layers 2 & 3 on the MXU with explicitly pinned bf16 operands and f32
    # accumulation (MXU-native on v5e/v6e/v7x); bias adds / ReLU stay f32.
    h2 = jnp.dot(h1.astype(jnp.bfloat16), w2,
                 preferred_element_type=jnp.float32) + b2
    h2 = jnp.maximum(h2, 0.0)
    q = jnp.dot(h2.astype(jnp.bfloat16), w3,
                preferred_element_type=jnp.float32) + b3

    # Narrow (TB, N_ACTIONS) store: only the real Q-value lanes hit HBM.
    o_ref[...] = q[:, :N_ACTIONS].astype(o_ref.dtype)


def pack_params(params):
    """Pack params into (f32 slab (32,128), bf16 slab (256,128))."""

    def pad2(a, rows, dtype):
        a = jnp.asarray(a, jnp.float32)
        out = jnp.zeros((rows, LANES), jnp.float32)
        out = out.at[: a.shape[0], : a.shape[1]].set(a)
        return out.astype(dtype)

    slab_f32 = jnp.concatenate(
        [
            pad2(params["w1"], 8, jnp.float32),
            pad2(params["b1"], 8, jnp.float32),
            pad2(params["b2"], 8, jnp.float32),
            pad2(params["b3"], 8, jnp.float32),
        ],
        axis=0,
    )
    slab_bf16 = jnp.concatenate(
        [
            pad2(params["w2"], 128, jnp.bfloat16),
            pad2(params["w3"], 128, jnp.bfloat16),
        ],
        axis=0,
    )
    return slab_f32, slab_bf16


def dqnn_forward(x, packed_params, *, block_rows=1024):
    """Fused MLP forward (Q-values) via a single pallas_call.

    x: (B, OBS_DIM) float32
    packed_params: (slab_f32 (32,128) f32, slab_bf16 (256,128) bf16) from pack_params()
    returns: (B, N_ACTIONS) float32 Q-values
    """
    slab_f32, slab_bf16 = packed_params
    B, obs = x.shape
    assert obs == OBS_DIM
    assert slab_f32.shape == (_F32_ROWS, LANES) and slab_f32.dtype == jnp.float32
    assert slab_bf16.shape == (_BF16_ROWS, LANES) and slab_bf16.dtype == jnp.bfloat16

    # Balanced row tiling: pick the number of tiles first (cap tile size at
    # block_rows), force >= 2 tiles when the batch permits so both v7x
    # TensorCores get work, then balance rows across tiles.  Padding per
    # batch is then bounded by (ntiles * 8 - 1) rows instead of a whole tile.
    block_rows = max(8, _round_up(block_rows, 8))
    ntiles = max(1, -(-B // block_rows))
    if ntiles == 1 and B > 8:
        ntiles = 2
    tb = _round_up(-(-B // ntiles), 8)
    bp = _round_up(B, tb)
    if bp != B:
        x = jnp.pad(x, ((0, bp - B), (0, 0)))

    out = pl.pallas_call(
        _dqn_mlp_kernel,
        out_shape=jax.ShapeDtypeStruct((bp, N_ACTIONS), jnp.float32),
        grid=(bp // tb,),
        in_specs=[
            # activations: tile the batch axis
            pl.BlockSpec((tb, OBS_DIM), lambda i: (i, 0)),
            # packed parameters: constant index_map -> DMA'd once, resident
            pl.BlockSpec((_F32_ROWS, LANES), lambda i: (0, 0)),
            pl.BlockSpec((_BF16_ROWS, LANES), lambda i: (0, 0)),
        ],
        out_specs=pl.BlockSpec((tb, N_ACTIONS), lambda i: (i, 0)),
        compiler_params=pltpu.CompilerParams(
            dimension_semantics=("parallel",)),
    )(x, slab_f32, slab_bf16)

    return out if bp == B else out[:B]


def init_params(key, obs_dim=OBS_DIM, hidden=HIDDEN, n_actions=N_ACTIONS):
    """Deterministic init mimicking torch.nn.Linear (uniform +/- 1/sqrt(fan_in))."""
    ks = jax.random.split(key, 6)

    def linear(kw, kb, fan_in, fan_out):
        bound = 1.0 / jnp.sqrt(jnp.float32(fan_in))
        w = jax.random.uniform(kw, (fan_in, fan_out), jnp.float32, -bound, bound)
        b = jax.random.uniform(kb, (1, fan_out), jnp.float32, -bound, bound)
        return w, b

    w1, b1 = linear(ks[0], ks[1], obs_dim, hidden)
    w2, b2 = linear(ks[2], ks[3], hidden, hidden)
    w3, b3 = linear(ks[4], ks[5], hidden, n_actions)
    return {"w1": w1, "b1": b1, "w2": w2, "b2": b2, "w3": w3, "b3": b3}


def reference_forward(x, p):
    """Pure-JAX reference with the SAME pinned numerics as the kernel:
    exact-f32 layer 1, bf16-operand / f32-accumulate MXU layers 2-3."""
    hi = jax.lax.Precision.HIGHEST
    h1 = jnp.maximum(jnp.dot(x, p["w1"], precision=hi) + p["b1"], 0.0)
    h2 = jnp.maximum(
        jnp.dot(h1.astype(jnp.bfloat16), p["w2"].astype(jnp.bfloat16),
                preferred_element_type=jnp.float32) + p["b2"], 0.0)
    return (jnp.dot(h2.astype(jnp.bfloat16), p["w3"].astype(jnp.bfloat16),
                    preferred_element_type=jnp.float32) + p["b3"])


if __name__ == "__main__":
    key = jax.random.PRNGKey(0)
    k_param, k_x = jax.random.split(key)

    BATCH = 8  # small demo batch; kernel pads/tiles arbitrary B
    params = init_params(k_param)
    packed = pack_params(params)

    # CartPole raw state: (batch, 4)
    x = jax.random.normal(k_x, (BATCH, OBS_DIM), jnp.float32)

    q = dqnn_forward(x, packed)
    q = jax.block_until_ready(q)

    q_ref = reference_forward(x, params)
    assert q.shape == (BATCH, N_ACTIONS)
    assert jnp.allclose(q, q_ref, atol=1e-4, rtol=1e-4), "mismatch vs JAX reference"

    print("KERNEL_OK")
</pallas_src>

<mosaic_0001>
module attributes {stable_mosaic.version = 11 : i64} {
  func.func @_dqn_mlp_kernel(%arg0: i32, %arg1: memref<8x4xf32, #tpu.memory_space<vmem>>, %arg2: memref<32x128xf32, #tpu.memory_space<vmem>>, %arg3: memref<256x128xbf16, #tpu.memory_space<vmem>>, %arg4: memref<8x2xf32, #tpu.memory_space<vmem>>) attributes {dimension_semantics = [#tpu.dimension_semantics<parallel>], iteration_bounds = array<i64: 1>, scalar_prefetch = 0 : i64, scratch_operands = 0 : i64, tpu.core_type = #tpu.core_type<tc>, window_params = [{transform_indices = @transform_0, window_bounds = array<i64: 8, 4>}, {pipeline_mode = #tpu.pipeline_mode<synchronous>, transform_indices = @transform_1, window_bounds = array<i64: 32, 128>}, {pipeline_mode = #tpu.pipeline_mode<synchronous>, transform_indices = @transform_2, window_bounds = array<i64: 256, 128>}, {transform_indices = @transform_3, window_bounds = array<i64: 8, 2>}]} {
    %c0 = arith.constant 0 : index
    %c0_0 = arith.constant 0 : index
    %0 = vector.load %arg1[%c0, %c0_0] : memref<8x4xf32, #tpu.memory_space<vmem>>, vector<8x4xf32>
    %c0_1 = arith.constant 0 : index
    %c0_2 = arith.constant 0 : index
    %1 = vector.load %arg2[%c0_1, %c0_2] : memref<32x128xf32, #tpu.memory_space<vmem>>, vector<8x128xf32>
    %c8 = arith.constant 8 : index
    %c0_3 = arith.constant 0 : index
    %2 = vector.load %arg2[%c8, %c0_3] : memref<32x128xf32, #tpu.memory_space<vmem>>, vector<1x128xf32>
    %c16 = arith.constant 16 : index
    %c0_4 = arith.constant 0 : index
    %3 = vector.load %arg2[%c16, %c0_4] : memref<32x128xf32, #tpu.memory_space<vmem>>, vector<1x128xf32>
    %c24 = arith.constant 24 : index
    %c0_5 = arith.constant 0 : index
    %4 = vector.load %arg2[%c24, %c0_5] : memref<32x128xf32, #tpu.memory_space<vmem>>, vector<1x128xf32>
    %c0_6 = arith.constant 0 : index
    %c0_7 = arith.constant 0 : index
    %5 = vector.load %arg3[%c0_6, %c0_7] : memref<256x128xbf16, #tpu.memory_space<vmem>>, vector<128x128xbf16>
    %c128 = arith.constant 128 : index
    %c0_8 = arith.constant 0 : index
    %6 = vector.load %arg3[%c128, %c0_8] : memref<256x128xbf16, #tpu.memory_space<vmem>>, vector<128x128xbf16>
    %7 = vector.extract_strided_slice %0 {offsets = [0, 0], sizes = [8, 1], strides = [1, 1]} : vector<8x4xf32> to vector<8x1xf32>
    %8 = vector.extract_strided_slice %1 {offsets = [0, 0], sizes = [1, 128], strides = [1, 1]} : vector<8x128xf32> to vector<1x128xf32>
    %9 = vector.broadcast %7 : vector<8x1xf32> to vector<8x128xf32>
    %10 = vector.broadcast %8 : vector<1x128xf32> to vector<8x128xf32>
    %11 = arith.mulf %9, %10 : vector<8x128xf32>
    %12 = vector.broadcast %2 : vector<1x128xf32> to vector<8x128xf32>
    %13 = arith.addf %11, %12 : vector<8x128xf32>
    %14 = vector.extract_strided_slice %0 {offsets = [0, 1], sizes = [8, 1], strides = [1, 1]} : vector<8x4xf32> to vector<8x1xf32>
    %15 = vector.extract_strided_slice %1 {offsets = [1, 0], sizes = [1, 128], strides = [1, 1]} : vector<8x128xf32> to vector<1x128xf32>
    %16 = vector.broadcast %14 : vector<8x1xf32> to vector<8x128xf32>
    %17 = vector.broadcast %15 : vector<1x128xf32> to vector<8x128xf32>
    %18 = arith.mulf %16, %17 : vector<8x128xf32>
    %19 = arith.addf %13, %18 : vector<8x128xf32>
    %20 = vector.extract_strided_slice %0 {offsets = [0, 2], sizes = [8, 1], strides = [1, 1]} : vector<8x4xf32> to vector<8x1xf32>
    %21 = vector.extract_strided_slice %1 {offsets = [2, 0], sizes = [1, 128], strides = [1, 1]} : vector<8x128xf32> to vector<1x128xf32>
    %22 = vector.broadcast %20 : vector<8x1xf32> to vector<8x128xf32>
    %23 = vector.broadcast %21 : vector<1x128xf32> to vector<8x128xf32>
    %24 = arith.mulf %22, %23 : vector<8x128xf32>
    %25 = arith.addf %19, %24 : vector<8x128xf32>
    %26 = vector.extract_strided_slice %0 {offsets = [0, 3], sizes = [8, 1], strides = [1, 1]} : vector<8x4xf32> to vector<8x1xf32>
    %27 = vector.extract_strided_slice %1 {offsets = [3, 0], sizes = [1, 128], strides = [1, 1]} : vector<8x128xf32> to vector<1x128xf32>
    %28 = vector.broadcast %26 : vector<8x1xf32> to vector<8x128xf32>
    %29 = vector.broadcast %27 : vector<1x128xf32> to vector<8x128xf32>
    %30 = arith.mulf %28, %29 : vector<8x128xf32>
    %31 = arith.addf %25, %30 : vector<8x128xf32>
    %cst = arith.constant 0.000000e+00 : f32
    %32 = vector.broadcast %cst : f32 to vector<8x128xf32>
    %33 = arith.maximumf %31, %32 : vector<8x128xf32>
    %34 = arith.truncf %33 : vector<8x128xf32> to vector<8x128xbf16>
    %cst_9 = arith.constant dense<0.000000e+00> : vector<8x128xf32>
    %35 = tpu.matmul %34, %5, %cst_9 {dimension_numbers = #tpu.dot_dimension_numbers<[1], [0], [0], [1], [0, 0, 1, 1], [], []>} : vector<8x128xbf16>, vector<128x128xbf16>, vector<8x128xf32> -> vector<8x128xf32>
    %36 = vector.broadcast %3 : vector<1x128xf32> to vector<8x128xf32>
    %37 = arith.addf %35, %36 : vector<8x128xf32>
    %cst_10 = arith.constant 0.000000e+00 : f32
    %38 = vector.broadcast %cst_10 : f32 to vector<8x128xf32>
    %39 = arith.maximumf %37, %38 : vector<8x128xf32>
    %40 = arith.truncf %39 : vector<8x128xf32> to vector<8x128xbf16>
    %cst_11 = arith.constant dense<0.000000e+00> : vector<8x128xf32>
    %41 = tpu.matmul %40, %6, %cst_11 {dimension_numbers = #tpu.dot_dimension_numbers<[1], [0], [0], [1], [0, 0, 1, 1], [], []>} : vector<8x128xbf16>, vector<128x128xbf16>, vector<8x128xf32> -> vector<8x128xf32>
    %42 = vector.broadcast %4 : vector<1x128xf32> to vector<8x128xf32>
    %43 = arith.addf %41, %42 : vector<8x128xf32>
    %44 = vector.extract_strided_slice %43 {offsets = [0, 0], sizes = [8, 2], strides = [1, 1]} : vector<8x128xf32> to vector<8x2xf32>
    %c0_12 = arith.constant 0 : index
    %c0_13 = arith.constant 0 : index
    %45 = vector.load %arg4[%c0_12, %c0_13] : memref<8x2xf32, #tpu.memory_space<vmem>>, vector<8x2xf32>
    tpu.vector_store %arg4[%c0_12, %c0_13], %44 {strides = array<i32>} : memref<8x2xf32, #tpu.memory_space<vmem>>, vector<8x2xf32>,
    return
  }
  func.func @transform_0(%arg0: i32) -> (i32, i32) {
    %c0_i32 = arith.constant 0 : i32
    %c0_i32_0 = arith.constant 0 : i32
    return %arg0, %c0_i32 : i32, i32
  }
  func.func @transform_1(%arg0: i32) -> (i32, i32) {
    %c0_i32 = arith.constant 0 : i32
    %c0_i32_0 = arith.constant 0 : i32
    %c0_i32_1 = arith.constant 0 : i32
    return %c0_i32, %c0_i32_0 : i32, i32
  }
  func.func @transform_2(%arg0: i32) -> (i32, i32) {
    %c0_i32 = arith.constant 0 : i32
    %c0_i32_0 = arith.constant 0 : i32
    %c0_i32_1 = arith.constant 0 : i32
    return %c0_i32, %c0_i32_0 : i32, i32
  }
  func.func @transform_3(%arg0: i32) -> (i32, i32) {
    %c0_i32 = arith.constant 0 : i32
    %c0_i32_0 = arith.constant 0 : i32
    return %arg0, %c0_i32 : i32, i32
  }
}

</mosaic_0001>

<llo_original>
// kernel: tpu_custom_call.1
$region0: #{tpu_custom_call.1}
  #allocation0 [shape = 'u32[]', space=smem, size = 0x4, offset = 0x4, fixed_abs, tag = 'smem constant byte address 0x4 - core index']
  #allocation1 [shape = 'u32[72,128]{1,0:T(1,128)}', space=vmem, size = 0x9000, scoped, tag = 'internal scratch']
  %s0 = inlined_call_operand.vmem [shape: f32[8,4], index: 0, kind: input, shape index: {}]
  %s1 = inlined_call_operand.hbm [shape: f32[32,128], index: 1, kind: input, shape index: {}]
  %s2 = inlined_call_operand.hbm [shape: bf16[256,128], index: 2, kind: input, shape index: {}]
  %s3 = inlined_call_operand.vmem [shape: f32[8,2], index: 3, kind: output, shape index: {}]
  %s4 = sld [smem:[#allocation0]]
  $region30: #{tpu_custom_call.1} parent=0
    _
  %s6 = ssub.s32 1, %s4
  %s7 = scalar_select 0, %s6, %s4
  $region1: #{tpu_custom_call.1} parent=0
    #allocation2 [shape = 'u8[16384]{0}', space=vmem, size = 0x4000, scoped, tag = 'input window, operand 1, single buffered']
    #allocation3 [shape = 's32[1]{0}', space=sflag, size = 0x4, scoped, tag = 'scoped memory for tpu_custom_call.1']
    #allocation4 [shape = 'u8[65536]{0}', space=vmem, size = 0x10000, scoped, tag = 'input window, operand 2, single buffered']
    #allocation5 [shape = 's32[1]{0}', space=sflag, size = 0x4, scoped, tag = 'scoped memory for tpu_custom_call.1']
    %8 = vsyncpa [#allocation3], 0
    %9 = vsyncpa [#allocation5], 0
    // Predicated region
    $region2: #{tpu_custom_call.1} parent=1 // pred_check
      _
    $region3: #{tpu_custom_call.1} parent=1 // pred_check_branch
      %11 = sbr.rel (0) target = $region5
    $region4: #{tpu_custom_call.1} parent=1 // pred_region
      _
    $region5: #{tpu_custom_call.1} parent=1 // pred_fallthru
      _
    // Predicated region
    $region6: #{tpu_custom_call.1} parent=1 // pred_check
      _
    $region7: #{tpu_custom_call.1} parent=1 // pred_check_branch
      %13 = sbr.rel (0) target = $region9
    $region8: #{tpu_custom_call.1} parent=1 // pred_region
      %15 = vsyncadd [#allocation3], 0
      %s16 = sshll.u32 %s1, 4
      %s17 = int_to_ptr.hbm [resolvable:$true] %s16
      %s18 = sshll.u32 [#allocation2], 4
      %s19 = int_to_ptr.vmem [resolvable:$true] %s18
      %24 = dma.hbm_to_vmem [thread:$0]  %s17, 512, %s19, [#allocation3], 128, 128, 8
    $region9: #{tpu_custom_call.1} parent=1 // pred_fallthru
      _
    // Predicated region
    $region10: #{tpu_custom_call.1} parent=1 // pred_check
      _
    $region11: #{tpu_custom_call.1} parent=1 // pred_check_branch
      %26 = sbr.rel (0) target = $region13
    $region12: #{tpu_custom_call.1} parent=1 // pred_region
      %28 = vsyncadd [#allocation5], 0
      %s29 = sshll.u32 %s2, 4
      %s30 = int_to_ptr.hbm [resolvable:$true] %s29
      %s31 = sshll.u32 [#allocation4], 4
      %s32 = int_to_ptr.vmem [resolvable:$true] %s31
      %37 = dma.hbm_to_vmem [thread:$0]  %s30, 2048, %s32, [#allocation5], 64, 64, 4
    $region13: #{tpu_custom_call.1} parent=1 // pred_fallthru
      _
    // Predicated region
    $region14: #{tpu_custom_call.1} parent=1 // pred_check
      _
    $region15: #{tpu_custom_call.1} parent=1 // pred_check_branch
      %39 = sbr.rel (0) target = $region17
    $region16: #{tpu_custom_call.1} parent=1 // pred_region
      %41 = dma.done [#allocation3], 512
    $region17: #{tpu_custom_call.1} parent=1 // pred_fallthru
      _
    // Predicated region
    $region18: #{tpu_custom_call.1} parent=1 // pred_check
      _
    $region19: #{tpu_custom_call.1} parent=1 // pred_check_branch
      %43 = sbr.rel (0) target = $region21
    $region20: #{tpu_custom_call.1} parent=1 // pred_region
      %45 = dma.done [#allocation5], 2048
    $region21: #{tpu_custom_call.1} parent=1 // pred_fallthru
      _
    %v46 = vld [vmem:[%s0] sm:$0xff]
    %v47 = vld [vmem:[#allocation2] sm:$0xff]
    %v48 = vld [vmem:[#allocation2 + $0x8] sm:$0x1]
    %v49 = vld [vmem:[#allocation2 + $0x10] sm:$0x1]
    %v50 = vld [vmem:[#allocation2 + $0x18] sm:$0x1]
    %v51 = vld [vmem:[#allocation4] sm:$0xf]
    %v52 = vld [vmem:[#allocation4 + $0x4] sm:$0xf]
    %v53 = vld [vmem:[#allocation4 + $0x8] sm:$0xf]
    %v54 = vld [vmem:[#allocation4 + $0xc] sm:$0xf]
    %v55 = vld [vmem:[#allocation4 + $0x10] sm:$0xf]
    %v56 = vld [vmem:[#allocation4 + $0x14] sm:$0xf]
    %v57 = vld [vmem:[#allocation4 + $0x18] sm:$0xf]
    %v58 = vld [vmem:[#allocation4 + $0x1c] sm:$0xf]
    %v59 = vld [vmem:[#allocation4 + $0x20] sm:$0xf]
    %v60 = vld [vmem:[#allocation4 + $0x24] sm:$0xf]
    %v61 = vld [vmem:[#allocation4 + $0x28] sm:$0xf]
    %v62 = vld [vmem:[#allocation4 + $0x2c] sm:$0xf]
    %v63 = vld [vmem:[#allocation4 + $0x30] sm:$0xf]
    %v64 = vld [vmem:[#allocation4 + $0x34] sm:$0xf]
    %v65 = vld [vmem:[#allocation4 + $0x38] sm:$0xf]
    %v66 = vld [vmem:[#allocation4 + $0x3c] sm:$0xf]
    %v67 = vld [vmem:[#allocation4 + $0x40] sm:$0xf]
    %v68 = vld [vmem:[#allocation4 + $0x44] sm:$0xf]
    %v69 = vld [vmem:[#allocation4 + $0x48] sm:$0xf]
    %v70 = vld [vmem:[#allocation4 + $0x4c] sm:$0xf]
    %v71 = vld [vmem:[#allocation4 + $0x50] sm:$0xf]
    %v72 = vld [vmem:[#allocation4 + $0x54] sm:$0xf]
    %v73 = vld [vmem:[#allocation4 + $0x58] sm:$0xf]
    %v74 = vld [vmem:[#allocation4 + $0x5c] sm:$0xf]
    %v75 = vld [vmem:[#allocation4 + $0x60] sm:$0xf]
    %v76 = vld [vmem:[#allocation4 + $0x64] sm:$0xf]
    %v77 = vld [vmem:[#allocation4 + $0x68] sm:$0xf]
    %v78 = vld [vmem:[#allocation4 + $0x6c] sm:$0xf]
    %v79 = vld [vmem:[#allocation4 + $0x70] sm:$0xf]
    %v80 = vld [vmem:[#allocation4 + $0x74] sm:$0xf]
    %v81 = vld [vmem:[#allocation4 + $0x78] sm:$0xf]
    %v82 = vld [vmem:[#allocation4 + $0x7c] sm:$0xf]
    %84 = vset.pattern.permute.xlu0 0
    %85 = vperm.xlu0 %84, %v46
    %v86 = vpop.permute.xlu0 %85
    %v88 = vperm.slane %v47, 0
    %v89 = vmul.f32 %v86, %v88
    %v90 = vperm.slane %v48, 0
    %v91 = vadd.f32 %v89, %v90
    %92 = vset.pattern.permute.xlu0 1
    %93 = vperm.xlu0 %92, %v46
    %v94 = vpop.permute.xlu0 %93
    %v96 = vperm.slane %v47, 1
    %v97 = vmul.f32 %v94, %v96
    %v98 = vadd.f32 %v91, %v97
    %99 = vset.pattern.permute.xlu0 2
    %100 = vperm.xlu0 %99, %v46
    %v101 = vpop.permute.xlu0 %100
    %v103 = vperm.slane %v47, 2
    %v104 = vmul.f32 %v101, %v103
    %v105 = vadd.f32 %v98, %v104
    %106 = vset.pattern.permute.xlu0 3
    %107 = vperm.xlu0 %106, %v46
    %v108 = vpop.permute.xlu0 %107
    %v110 = vperm.slane %v47, 3
    %v111 = vmul.f32 %v108, %v110
    %v112 = vadd.f32 %v105, %v111
    %v113 = vmax.f32 %v112, 0.0
    %v114 = vpack.c.bf16 %v113, %v113
    %v115 = vperm.slane %v49, 0
    %v132 = vunpack.c.l.b16 %v51
    %v133 = vunpack.c.l.b16 %v52
    %v134 = vunpack.c.l.b16 %v53
    %v135 = vunpack.c.l.b16 %v54
    %v136 = vunpack.c.l.b16 %v55
    %v137 = vunpack.c.l.b16 %v56
    %v138 = vunpack.c.l.b16 %v57
    %v139 = vunpack.c.l.b16 %v58
    %v140 = vunpack.c.l.b16 %v59
    %v141 = vunpack.c.l.b16 %v60
    %v142 = vunpack.c.l.b16 %v61
    %v143 = vunpack.c.l.b16 %v62
    %v144 = vunpack.c.l.b16 %v63
    %v145 = vunpack.c.l.b16 %v64
    %v146 = vunpack.c.l.b16 %v65
    %v147 = vunpack.c.l.b16 %v66
    %v148 = vpack.c.b16 %v133, %v132
    %v149 = vpack.c.b16 %v135, %v134
    %v150 = vpack.c.b16 %v137, %v136
    %v151 = vpack.c.b16 %v139, %v138
    %v152 = vpack.c.b16 %v141, %v140
    %v153 = vpack.c.b16 %v143, %v142
    %v154 = vpack.c.b16 %v145, %v144
    %v155 = vpack.c.b16 %v147, %v146
    %164 = vmatpush.bf16.msra.mxu0 %v155
    %165 = vmatpush.bf16.msra.mxu0 %v154
    %166 = vmatpush.bf16.msra.mxu0 %v153
    %167 = vmatpush.bf16.msra.mxu0 %v152
    %168 = vmatpush.bf16.msra.mxu0 %v151
    %169 = vmatpush.bf16.msra.mxu0 %v150
    %170 = vmatpush.bf16.msra.mxu0 %v149
    %171 = vmatpush.bf16.msra.mxu0 %v148
    %172 = vmatmul.bf16.gmra.mxu0 %v114
    %v173 = vpop.f32.mrf.mxu0
    %v174 = vadd.f32 %v115, %v173
    %v175 = vpop.f32.mrf.mxu0
    %176 = vdwg.mxu0
    %v177 = vmax.f32 %v174, 0.0
    %v178 = vpack.c.bf16 %v177, %v177
    %v179 = vperm.slane %v50, 0
    %v196 = vunpack.c.l.b16 %v67
    %v197 = vunpack.c.l.b16 %v68
    %v198 = vunpack.c.l.b16 %v69
    %v199 = vunpack.c.l.b16 %v70
    %v200 = vunpack.c.l.b16 %v71
    %v201 = vunpack.c.l.b16 %v72
    %v202 = vunpack.c.l.b16 %v73
    %v203 = vunpack.c.l.b16 %v74
    %v204 = vunpack.c.l.b16 %v75
    %v205 = vunpack.c.l.b16 %v76
    %v206 = vunpack.c.l.b16 %v77
    %v207 = vunpack.c.l.b16 %v78
    %v208 = vunpack.c.l.b16 %v79
    %v209 = vunpack.c.l.b16 %v80
    %v210 = vunpack.c.l.b16 %v81
    %v211 = vunpack.c.l.b16 %v82
    %v212 = vpack.c.b16 %v197, %v196
    %v213 = vpack.c.b16 %v199, %v198
    %v214 = vpack.c.b16 %v201, %v200
    %v215 = vpack.c.b16 %v203, %v202
    %v216 = vpack.c.b16 %v205, %v204
    %v217 = vpack.c.b16 %v207, %v206
    %v218 = vpack.c.b16 %v209, %v208
    %v219 = vpack.c.b16 %v211, %v210
    %228 = vmatpush.bf16.msra.mxu0 %v219
    %229 = vmatpush.bf16.msra.mxu0 %v218
    %230 = vmatpush.bf16.msra.mxu0 %v217
    %231 = vmatpush.bf16.msra.mxu0 %v216
    %232 = vmatpush.bf16.msra.mxu0 %v215
    %233 = vmatpush.bf16.msra.mxu0 %v214
    %234 = vmatpush.bf16.msra.mxu0 %v213
    %235 = vmatpush.bf16.msra.mxu0 %v212
    %236 = vmatmul.bf16.gmra.mxu0 %v178
    %v237 = vpop.f32.mrf.mxu0
    %v238 = vadd.f32 %v179, %v237
    %v239 = vpop.f32.mrf.mxu0
    %240 = vdwg.mxu0
    %vm241 = vcmask 15360
    %242 = vst.msk [vmem:[%s3] sm:$0xff] %vm241, %v238
    // Predicated region
    $region22: #{tpu_custom_call.1} parent=1 // pred_check
      _
    $region23: #{tpu_custom_call.1} parent=1 // pred_check_branch
      %244 = sbr.rel (0) target = $region25
    $region24: #{tpu_custom_call.1} parent=1 // pred_region
      _
    $region25: #{tpu_custom_call.1} parent=1 // pred_fallthru
      _
    // Predicated region
    $region26: #{tpu_custom_call.1} parent=1 // pred_check
      _
    $region27: #{tpu_custom_call.1} parent=1 // pred_check_branch
      %246 = sbr.rel (0) target = $region29
    $region28: #{tpu_custom_call.1} parent=1 // pred_region
      _
    $region29: #{tpu_custom_call.1} parent=1 // pred_fallthru
      _
    %247 = vsyncpa [#allocation3], 1
    %248 = vsyncpa [#allocation5], 1

</llo_original>
